<compile_context>
chip_gen: v7x
topology: tpu7x:2x2x1
jax: 0.10.0
libtpu: 0.0.40
codegen_flags: <defaults>
</compile_context>

<pallas_src>
import functools
import math

import jax
import jax.numpy as jnp
from jax.experimental import pallas as pl
from jax.experimental.pallas import tpu as pltpu

_LANE = 128      # lane width: last dim of stored blocks padded to this
_ROW_PACK = 16   # bf16 packs (16,128) per vreg; batch tiles rounded to this
_SLACK = 4 << 20


def _round_up(n, m):
    return ((n + m - 1) // m) * m


def _cdiv(a, b):
    return (a + b - 1) // b


def _device_vmem_budget():
    """~85% of per-core VMEM; conservative 64 MiB (v7x) fallback."""
    cap = None
    try:
        info = pltpu.get_tpu_info()
        for name in ("vmem_capacity_bytes", "vmem_bytes"):
            cap = getattr(info, name, None)
            if cap:
                break
    except Exception:
        cap = None
    if not cap:
        cap = 64 << 20
    return int(cap * 0.85)


def _const_spec(shape):
    """BlockSpec for a grid-invariant operand, single-buffered."""
    idx = lambda *_: (0,) * len(shape)
    try:
        return pl.BlockSpec(shape, idx, pipeline_mode=pl.Buffered(1))
    except TypeError:  # older jax without pipeline_mode: default double-buffer
        return pl.BlockSpec(shape, idx)


# ----------------------------------------------------------------------------
# Kernels
# ----------------------------------------------------------------------------
def _linear_kernel(x_ref, w_ref, b_ref, o_ref):
    """Single Linear: o = x @ w + b   (f32 accumulation, f32 bias add)."""
    x = x_ref[...].astype(w_ref.dtype)
    acc = jnp.dot(x, w_ref[...], preferred_element_type=jnp.float32)
    o_ref[...] = (acc + b_ref[...]).astype(o_ref.dtype)


def _linear_kt_kernel(x_ref, w_ref, b_ref, o_ref, acc_ref):
    """K-tiled Linear: accumulate partial products over the K grid axis."""
    k = pl.program_id(1)

    @pl.when(k == 0)
    def _init():
        acc_ref[...] = jnp.zeros_like(acc_ref)

    acc_ref[...] += jnp.dot(x_ref[...].astype(w_ref.dtype), w_ref[...],
                            preferred_element_type=jnp.float32)

    @pl.when(k == pl.num_programs(1) - 1)
    def _finalize():
        o_ref[...] = (acc_ref[...] + b_ref[...]).astype(o_ref.dtype)


def _mlp_kernel(x_ref, w1_ref, b1_ref, w2_ref, b2_ref, o_ref, *, act):
    """Fused Linear -> activation -> Linear; hidden stays in VMEM/vregs."""
    x = x_ref[...].astype(w1_ref.dtype)
    h = jnp.dot(x, w1_ref[...], preferred_element_type=jnp.float32)
    h = act(h + b1_ref[...])                 # bias add + activation in f32
    h = h.astype(w2_ref.dtype)
    o = jnp.dot(h, w2_ref[...], preferred_element_type=jnp.float32)
    o_ref[...] = (o + b2_ref[...]).astype(o_ref.dtype)


def _mlp_kt_kernel(x_ref, w1_ref, b1_ref, w2_ref, b2_ref, o_ref, hacc_ref, *, act):
    """Fused MLP with the first matmul K-tiled over the grid's K axis."""
    k = pl.program_id(1)

    @pl.when(k == 0)
    def _init():
        hacc_ref[...] = jnp.zeros_like(hacc_ref)

    hacc_ref[...] += jnp.dot(x_ref[...].astype(w1_ref.dtype), w1_ref[...],
                             preferred_element_type=jnp.float32)

    @pl.when(k == pl.num_programs(1) - 1)
    def _finalize():
        # Padded hidden columns may be nonzero after some activations (e.g.
        # Sigmoid(0)=0.5); that is harmless ONLY because the matching rows of
        # the zero-padded W2 are zero.  Keep that padding invariant.
        h = act(hacc_ref[...] + b1_ref[...]).astype(w2_ref.dtype)
        o = jnp.dot(h, w2_ref[...], preferred_element_type=jnp.float32)
        o_ref[...] = (o + b2_ref[...]).astype(o_ref.dtype)


_ACTIVATIONS = {
    "ReLU": lambda x: jnp.maximum(x, 0.0),
    "GELU": jax.nn.gelu,
    "Tanh": jnp.tanh,
    "Sigmoid": jax.nn.sigmoid,
}


# ----------------------------------------------------------------------------
# Parameter init (matches torch.nn.Linear defaults)
# ----------------------------------------------------------------------------
def _torch_linear_init(key, in_features, out_features):
    """nn.Linear default init: U(-1/sqrt(in), 1/sqrt(in)).
    Weight returned pre-transposed as (in_features, out_features)."""
    kw, kb = jax.random.split(key)
    bound = 1.0 / math.sqrt(in_features)
    w = jax.random.uniform(kw, (in_features, out_features), jnp.float32, -bound, bound)
    b = jax.random.uniform(kb, (1, out_features), jnp.float32, -bound, bound)
    return w, b


def _pad2d(a, rows, cols):
    return jnp.pad(a, ((0, rows - a.shape[0]), (0, cols - a.shape[1])))


# ----------------------------------------------------------------------------
# Wrapper ("module")
# ----------------------------------------------------------------------------
class ProjectionHead:
    def __init__(self, input_dim, output_dim, hidden_dim=512, activation_func=None,
                 *, key=None, compute_dtype=jnp.bfloat16, max_block_rows=1024,
                 k_tile=512, force_k_tiling=None):
        if key is None:
            key = jax.random.PRNGKey(0)
        if activation_func is not None and activation_func not in _ACTIVATIONS:
            raise ValueError(f"unsupported activation: {activation_func}")

        self.input_dim = input_dim
        self.output_dim = output_dim
        self.hidden_dim = hidden_dim
        self.activation_func = activation_func
        self.compute_dtype = jnp.dtype(compute_dtype)
        self.max_block_rows = max_block_rows

        self._budget = _device_vmem_budget()
        csize = self.compute_dtype.itemsize
        o_pad = _round_up(output_dim, _LANE)

        if activation_func is None:
            self.w, self.b = _torch_linear_init(key, input_dim, output_dim)
            resident = input_dim * o_pad * csize + o_pad * 4
        else:
            h_pad = _round_up(hidden_dim, _LANE)
            k1, k2 = jax.random.split(key)
            self.w1, self.b1 = _torch_linear_init(k1, input_dim, hidden_dim)
            self.w2, self.b2 = _torch_linear_init(k2, hidden_dim, output_dim)
            resident = ((input_dim * h_pad + h_pad * o_pad) * csize
                        + (h_pad + o_pad) * 4)

        # K-tiled path when full-width (single-buffered) weights would eat
        # more than ~1/3 of the VMEM budget (critical on v7x's 64 MiB).
        k_tiled = (resident > self._budget // 3) and (input_dim > k_tile)
        if force_k_tiling is not None:
            k_tiled = bool(force_k_tiling)
        self._k_tiled = k_tiled
        self._k_tile = min(k_tile, _round_up(input_dim, _LANE)) if k_tiled else input_dim

        # K dim of the stored weight padded with ZEROS to a multiple of the K
        # tile: the garbage columns of the partial last x K-block then multiply
        # zero weight rows and contribute nothing to the accumulator.
        d_kpad = _round_up(input_dim, self._k_tile) if k_tiled else input_dim

        if activation_func is None:
            self._w_p = _pad2d(self.w, d_kpad, o_pad).astype(self.compute_dtype)
            self._b_p = _pad2d(self.b, 1, o_pad)                     # f32 bias
        else:
            self._w1_p = _pad2d(self.w1, d_kpad, h_pad).astype(self.compute_dtype)
            self._b1_p = _pad2d(self.b1, 1, h_pad)                   # f32 bias
            # Rows hidden_dim..h_pad of W2 are zero: they cancel any nonzero
            # activation of the padded hidden columns (e.g. Sigmoid -> 0.5).
            self._w2_p = _pad2d(self.w2, h_pad, o_pad).astype(self.compute_dtype)
            self._b2_p = _pad2d(self.b2, 1, o_pad)                   # f32 bias

    # -- sizing helpers -------------------------------------------------------
    def _vmem_limit(self, need):
        return int(min(max(need + _SLACK, 32 << 20), self._budget))

    def _pick_tb(self, B, row_bytes, resident_bytes):
        """Batch tile from remaining VMEM budget; keep >= 2 grid steps for v7x."""
        avail = self._budget - resident_bytes - _SLACK
        tb = max(8, avail // max(row_bytes, 1))
        tb = min(tb, self.max_block_rows)
        tb = (tb // _ROW_PACK) * _ROW_PACK if tb >= _ROW_PACK else 8
        tb = min(tb, _round_up(B, 8))
        if B > 2 * _ROW_PACK and _cdiv(B, tb) < 2:
            # Split so the "parallel" batch axis can shard across both v7x TCs.
            tb = max(_ROW_PACK, _round_up(_cdiv(B, 2), _ROW_PACK))
        return int(tb)

    # -- forward --------------------------------------------------------------
    def __call__(self, x):
        B, D = x.shape
        assert D == self.input_dim
        xsize = jnp.dtype(x.dtype).itemsize
        csize = self.compute_dtype.itemsize
        if self.activation_func is None:
            return self._call_linear(x, B, D, xsize, csize)
        return self._call_mlp(x, B, D, xsize, csize)

    def _call_linear(self, x, B, D, xsize, csize):
        d_kpad, o_pad = self._w_p.shape

        if not self._k_tiled:
            w_bytes = d_kpad * o_pad * csize + o_pad * 4              # Buffered(1)
            row_bytes = (2 * D * xsize + 2 * o_pad * xsize            # streamed in/out
                         + D * csize + o_pad * 4)                     # cast + f32 result
            tb = self._pick_tb(B, row_bytes, w_bytes)
            out = pl.pallas_call(
                _linear_kernel,
                out_shape=jax.ShapeDtypeStruct((B, o_pad), x.dtype),
                grid_spec=pltpu.PrefetchScalarGridSpec(
                    num_scalar_prefetch=0,
                    grid=(_cdiv(B, tb),),
                    in_specs=[
                        pl.BlockSpec((tb, D), lambda i: (i, 0)),
                        _const_spec((d_kpad, o_pad)),
                        _const_spec((1, o_pad)),
                    ],
                    out_specs=pl.BlockSpec((tb, o_pad), lambda i: (i, 0)),
                ),
                compiler_params=pltpu.CompilerParams(
                    dimension_semantics=("parallel",),
                    vmem_limit_bytes=self._vmem_limit(w_bytes + tb * row_bytes)),
            )(x, self._w_p, self._b_p)
            return out[:, :self.output_dim]

        # K-tiled accumulator path.
        tk = self._k_tile
        nk = d_kpad // tk
        w_bytes = 2 * tk * o_pad * csize + o_pad * 4                  # w K-slice x2 + bias
        row_bytes = (2 * tk * xsize + 2 * o_pad * xsize
                     + tk * csize + 2 * o_pad * 4)                    # + f32 acc + result
        tb = self._pick_tb(B, row_bytes, w_bytes)
        out = pl.pallas_call(
            _linear_kt_kernel,
            out_shape=jax.ShapeDtypeStruct((B, o_pad), x.dtype),
            grid_spec=pltpu.PrefetchScalarGridSpec(
                num_scalar_prefetch=0,
                grid=(_cdiv(B, tb), nk),
                in_specs=[
                    pl.BlockSpec((tb, tk), lambda i, k: (i, k)),
                    pl.BlockSpec((tk, o_pad), lambda i, k: (k, 0)),
                    _const_spec((1, o_pad)),
                ],
                out_specs=pl.BlockSpec((tb, o_pad), lambda i, k: (i, 0)),
                scratch_shapes=[pltpu.VMEM((tb, o_pad), jnp.float32)],
            ),
            compiler_params=pltpu.CompilerParams(
                dimension_semantics=("parallel", "arbitrary"),
                vmem_limit_bytes=self._vmem_limit(w_bytes + tb * row_bytes)),
        )(x, self._w_p, self._b_p)
        return out[:, :self.output_dim]

    def _call_mlp(self, x, B, D, xsize, csize):
        act = _ACTIVATIONS[self.activation_func]
        d_kpad, h_pad = self._w1_p.shape
        o_pad = self._w2_p.shape[1]

        if not self._k_tiled:
            w_bytes = ((d_kpad * h_pad + h_pad * o_pad) * csize       # Buffered(1)
                       + (h_pad + o_pad) * 4)
            row_bytes = (2 * D * xsize + 2 * o_pad * xsize
                         + D * csize                                  # x cast
                         + h_pad * 4 + h_pad * csize                  # hidden f32 + cast
                         + o_pad * 4)                                 # out f32
            tb = self._pick_tb(B, row_bytes, w_bytes)
            kernel = functools.partial(_mlp_kernel, act=act)
            out = pl.pallas_call(
                kernel,
                out_shape=jax.ShapeDtypeStruct((B, o_pad), x.dtype),
                grid_spec=pltpu.PrefetchScalarGridSpec(
                    num_scalar_prefetch=0,
                    grid=(_cdiv(B, tb),),
                    in_specs=[
                        pl.BlockSpec((tb, D), lambda i: (i, 0)),
                        _const_spec((d_kpad, h_pad)),
                        _const_spec((1, h_pad)),
                        _const_spec((h_pad, o_pad)),
                        _const_spec((1, o_pad)),
                    ],
                    out_specs=pl.BlockSpec((tb, o_pad), lambda i: (i, 0)),
                ),
                compiler_params=pltpu.CompilerParams(
                    dimension_semantics=("parallel",),
                    vmem_limit_bytes=self._vmem_limit(w_bytes + tb * row_bytes)),
            )(x, self._w1_p, self._b1_p, self._w2_p, self._b2_p)
            return out[:, :self.output_dim]

        # K-tiled first matmul (K = input_dim); W2 stays resident full-width.
        # TODO(synk): also K-tile the second matmul (over h_pad) when
        # hidden_dim * output_dim alone exceeds the VMEM budget.
        tk = self._k_tile
        nk = d_kpad // tk
        w_bytes = (2 * tk * h_pad * csize                              # w1 slice x2
                   + h_pad * o_pad * csize + (h_pad + o_pad) * 4)      # w2 + biases x1
        row_bytes = (2 * tk * xsize + 2 * o_pad * xsize
                     + tk * csize
                     + h_pad * 4 + h_pad * csize                       # f32 hacc + cast
                     + o_pad * 4)
        tb = self._pick_tb(B, row_bytes, w_bytes)
        kernel = functools.partial(_mlp_kt_kernel, act=act)
        out = pl.pallas_call(
            kernel,
            out_shape=jax.ShapeDtypeStruct((B, o_pad), x.dtype),
            grid_spec=pltpu.PrefetchScalarGridSpec(
                num_scalar_prefetch=0,
                grid=(_cdiv(B, tb), nk),
                in_specs=[
                    pl.BlockSpec((tb, tk), lambda i, k: (i, k)),
                    pl.BlockSpec((tk, h_pad), lambda i, k: (k, 0)),
                    _const_spec((1, h_pad)),
                    _const_spec((h_pad, o_pad)),
                    _const_spec((1, o_pad)),
                ],
                out_specs=pl.BlockSpec((tb, o_pad), lambda i, k: (i, 0)),
                scratch_shapes=[pltpu.VMEM((tb, h_pad), jnp.float32)],
            ),
            compiler_params=pltpu.CompilerParams(
                dimension_semantics=("parallel", "arbitrary"),
                vmem_limit_bytes=self._vmem_limit(w_bytes + tb * row_bytes)),
        )(x, self._w1_p, self._b1_p, self._w2_p, self._b2_p)
        return out[:, :self.output_dim]

    # -- pure-JAX reference matching the kernel's dtype pipeline --------------
    def reference(self, x):
        cd = self.compute_dtype
        xf = x.astype(cd).astype(jnp.float32)
        if self.activation_func is None:
            w = self.w.astype(cd).astype(jnp.float32)
            return (xf @ w + self.b).astype(x.dtype)
        act = _ACTIVATIONS[self.activation_func]
        w1 = self.w1.astype(cd).astype(jnp.float32)
        w2 = self.w2.astype(cd).astype(jnp.float32)
        h = act(xf @ w1 + self.b1).astype(cd).astype(jnp.float32)
        return (h @ w2 + self.b2).astype(x.dtype)


# ----------------------------------------------------------------------------
# Demo / correctness check
# ----------------------------------------------------------------------------
if __name__ == "__main__":
    key = jax.random.PRNGKey(0)
    kx, kx2, kp1, kp2, kp3, kp4 = jax.random.split(key, 6)

    batch, input_dim, hidden_dim, output_dim = 8, 32, 64, 16
    x = jax.random.normal(kx, (batch, input_dim), dtype=jnp.float32)

    # Variant 1: activation_func=None -> single Linear.  f32 compute here is for
    # the exact check only; production should keep the bf16 default (f32 matmul
    # is multi-pass / much slower on v6e & v7x MXUs).
    head_lin = ProjectionHead(input_dim, output_dim, activation_func=None,
                              key=kp1, compute_dtype=jnp.float32)
    y_lin = jax.block_until_ready(head_lin(x))
    assert y_lin.shape == (batch, output_dim)
    assert jnp.allclose(y_lin, head_lin.reference(x), atol=1e-5, rtol=1e-5)

    # Variant 2: "ReLU" -> fused Linear-ReLU-Linear, bf16 operands / f32 accum.
    head_mlp = ProjectionHead(input_dim, output_dim, hidden_dim=hidden_dim,
                              activation_func="ReLU", key=kp2,
                              compute_dtype=jnp.bfloat16)
    y_mlp = jax.block_until_ready(head_mlp(x))
    assert y_mlp.shape == (batch, output_dim)
    assert jnp.allclose(y_mlp, head_mlp.reference(x), atol=2e-2, rtol=2e-2)

    # Variants 3/4: exercise the K-tiled accumulator path (engaged automatically
    # for large input_dim / tight VMEM) at small shapes to keep it test-covered.
    in2 = 256
    x2 = jax.random.normal(kx2, (batch, in2), dtype=jnp.float32)

    head_lin_kt = ProjectionHead(in2, output_dim, activation_func=None,
                                 key=kp3, compute_dtype=jnp.float32,
                                 force_k_tiling=True, k_tile=128)
    y_kt = jax.block_until_ready(head_lin_kt(x2))
    assert y_kt.shape == (batch, output_dim)
    assert jnp.allclose(y_kt, head_lin_kt.reference(x2), atol=1e-4, rtol=1e-4)

    head_mlp_kt = ProjectionHead(in2, output_dim, hidden_dim=hidden_dim,
                                 activation_func="ReLU", key=kp4,
                                 compute_dtype=jnp.bfloat16,
                                 force_k_tiling=True, k_tile=128)
    y_mkt = jax.block_until_ready(head_mlp_kt(x2))
    assert y_mkt.shape == (batch, output_dim)
    assert jnp.allclose(y_mkt, head_mlp_kt.reference(x2), atol=2e-2, rtol=2e-2)

    print("KERNEL_OK")
</pallas_src>

<mosaic_0001>
module attributes {stable_mosaic.version = 11 : i64} {
  func.func @_linear_kernel(%arg0: i32, %arg1: memref<8x32xf32, #tpu.memory_space<vmem>>, %arg2: memref<32x128xf32, #tpu.memory_space<vmem>>, %arg3: memref<1x128xf32, #tpu.memory_space<vmem>>, %arg4: memref<8x128xf32, #tpu.memory_space<vmem>>) attributes {dimension_semantics = [#tpu.dimension_semantics<parallel>], iteration_bounds = array<i64: 1>, scalar_prefetch = 0 : i64, scratch_operands = 0 : i64, tpu.core_type = #tpu.core_type<tc>, window_params = [{transform_indices = @transform_0, window_bounds = array<i64: 8, 32>}, {pipeline_mode = #tpu.pipeline_mode<synchronous>, transform_indices = @transform_1, window_bounds = array<i64: 32, 128>}, {pipeline_mode = #tpu.pipeline_mode<synchronous>, transform_indices = @transform_2, window_bounds = array<i64: 1, 128>}, {transform_indices = @transform_3, window_bounds = array<i64: 8, 128>}]} {
    %c0 = arith.constant 0 : index
    %c0_0 = arith.constant 0 : index
    %0 = vector.load %arg1[%c0, %c0_0] : memref<8x32xf32, #tpu.memory_space<vmem>>, vector<8x32xf32>
    %c0_1 = arith.constant 0 : index
    %c0_2 = arith.constant 0 : index
    %1 = vector.load %arg2[%c0_1, %c0_2] : memref<32x128xf32, #tpu.memory_space<vmem>>, vector<32x128xf32>
    %cst = arith.constant dense<0.000000e+00> : vector<8x128xf32>
    %2 = tpu.matmul %0, %1, %cst {dimension_numbers = #tpu.dot_dimension_numbers<[1], [0], [0], [1], [0, 0, 1, 1], [], []>} : vector<8x32xf32>, vector<32x128xf32>, vector<8x128xf32> -> vector<8x128xf32>
    %c0_3 = arith.constant 0 : index
    %c0_4 = arith.constant 0 : index
    %3 = vector.load %arg3[%c0_3, %c0_4] : memref<1x128xf32, #tpu.memory_space<vmem>>, vector<1x128xf32>
    %4 = vector.broadcast %3 : vector<1x128xf32> to vector<8x128xf32>
    %5 = arith.addf %2, %4 : vector<8x128xf32>
    %c0_5 = arith.constant 0 : index
    %c0_6 = arith.constant 0 : index
    %6 = vector.load %arg4[%c0_5, %c0_6] : memref<8x128xf32, #tpu.memory_space<vmem>>, vector<8x128xf32>
    tpu.vector_store %arg4[%c0_5, %c0_6], %5 {strides = array<i32>} : memref<8x128xf32, #tpu.memory_space<vmem>>, vector<8x128xf32>,
    return
  }
  func.func @transform_0(%arg0: i32) -> (i32, i32) {
    %c0_i32 = arith.constant 0 : i32
    %c0_i32_0 = arith.constant 0 : i32
    return %arg0, %c0_i32 : i32, i32
  }
  func.func @transform_1(%arg0: i32) -> (i32, i32) {
    %c0_i32 = arith.constant 0 : i32
    %c0_i32_0 = arith.constant 0 : i32
    %c0_i32_1 = arith.constant 0 : i32
    return %c0_i32, %c0_i32_0 : i32, i32
  }
  func.func @transform_2(%arg0: i32) -> (i32, i32) {
    %c0_i32 = arith.constant 0 : i32
    %c0_i32_0 = arith.constant 0 : i32
    %c0_i32_1 = arith.constant 0 : i32
    return %c0_i32, %c0_i32_0 : i32, i32
  }
  func.func @transform_3(%arg0: i32) -> (i32, i32) {
    %c0_i32 = arith.constant 0 : i32
    %c0_i32_0 = arith.constant 0 : i32
    return %arg0, %c0_i32 : i32, i32
  }
}

</mosaic_0001>

<llo_original>
// kernel: tpu_custom_call.1
$region0: #{tpu_custom_call.1}
  #allocation0 [shape = 'u32[]', space=smem, size = 0x4, offset = 0x4, fixed_abs, tag = 'smem constant byte address 0x4 - core index']
  #allocation1 [shape = 'u32[144,128]{1,0:T(1,128)}', space=vmem, size = 0x12000, scoped, tag = 'internal scratch']
  %s0 = inlined_call_operand.hbm [shape: f32[8,32], index: 0, kind: input, shape index: {}]
  %s1 = inlined_call_operand.hbm [shape: f32[32,128], index: 1, kind: input, shape index: {}]
  %s2 = inlined_call_operand.vmem [shape: f32[1,128], index: 2, kind: input, shape index: {}]
  %s3 = inlined_call_operand.hbm [shape: f32[8,128], index: 3, kind: output, shape index: {}]
  %s4 = sld [smem:[#allocation0]]
  $region30: #{tpu_custom_call.1} parent=0
    _
  %s6 = ssub.s32 1, %s4
  %s7 = scalar_select 0, %s6, %s4
  $region1: #{tpu_custom_call.1} parent=0
    #allocation2 [shape = 'u8[4096]{0}', space=vmem, size = 0x1000, scoped, tag = 'input window, operand 0, single buffered']
    #allocation3 [shape = 's32[1]{0}', space=sflag, size = 0x4, scoped, tag = 'scoped memory for tpu_custom_call.1']
    #allocation4 [shape = 's32[1]{0}', space=sflag, size = 0x4, scoped, tag = 'scoped memory for tpu_custom_call.1']
    #allocation5 [shape = 'u8[16384]{0}', space=vmem, size = 0x4000, scoped, tag = 'input window, operand 1, single buffered']
    #allocation6 [shape = 's32[1]{0}', space=sflag, size = 0x4, scoped, tag = 'scoped memory for tpu_custom_call.1']
    #allocation7 [shape = 'u8[4096]{0}', space=vmem, size = 0x1000, scoped, tag = 'output window, operand 0, single buffered']
    %8 = vsyncpa [#allocation3], 0
    %9 = vsyncpa [#allocation6], 0
    %10 = vsyncpa [#allocation4], 0
    // Predicated region
    $region2: #{tpu_custom_call.1} parent=1 // pred_check
      _
    $region3: #{tpu_custom_call.1} parent=1 // pred_check_branch
      %12 = sbr.rel (0) target = $region5
    $region4: #{tpu_custom_call.1} parent=1 // pred_region
      %s14 = ssub.s32 128, 128
      %15 = vsyncadd [#allocation3], %s14
      %s17 = sshll.u32 [#allocation2], 4
      %s18 = int_to_ptr.vmem [resolvable:$true] %s17
      %20 = dma.hbm_to_vmem [thread:$0]  %s0, 128, %s18, [#allocation3]
    $region5: #{tpu_custom_call.1} parent=1 // pred_fallthru
      _
    // Predicated region
    $region6: #{tpu_custom_call.1} parent=1 // pred_check
      _
    $region7: #{tpu_custom_call.1} parent=1 // pred_check_branch
      %22 = sbr.rel (0) target = $region9
    $region8: #{tpu_custom_call.1} parent=1 // pred_region
      %s24 = ssub.s32 512, 512
      %25 = vsyncadd [#allocation6], %s24
      %s26 = sshll.u32 [#allocation5], 4
      %s27 = int_to_ptr.vmem [resolvable:$true] %s26
      %32 = dma.hbm_to_vmem [thread:$0]  %s1, 512, %s27, [#allocation6], 128, 128, 8
    $region9: #{tpu_custom_call.1} parent=1 // pred_fallthru
      _
    // Predicated region
    $region10: #{tpu_custom_call.1} parent=1 // pred_check
      _
    $region11: #{tpu_custom_call.1} parent=1 // pred_check_branch
      %34 = sbr.rel (0) target = $region13
    $region12: #{tpu_custom_call.1} parent=1 // pred_region
      _
    $region13: #{tpu_custom_call.1} parent=1 // pred_fallthru
      _
    // Predicated region
    $region14: #{tpu_custom_call.1} parent=1 // pred_check
      _
    $region15: #{tpu_custom_call.1} parent=1 // pred_check_branch
      %36 = sbr.rel (0) target = $region17
    $region16: #{tpu_custom_call.1} parent=1 // pred_region
      %37 = dma.done [#allocation3], 128
    $region17: #{tpu_custom_call.1} parent=1 // pred_fallthru
      _
    // Predicated region
    $region18: #{tpu_custom_call.1} parent=1 // pred_check
      _
    $region19: #{tpu_custom_call.1} parent=1 // pred_check_branch
      %39 = sbr.rel (0) target = $region21
    $region20: #{tpu_custom_call.1} parent=1 // pred_region
      %40 = dma.done [#allocation6], 512
    $region21: #{tpu_custom_call.1} parent=1 // pred_fallthru
      _
    %v41 = vld [vmem:[#allocation2] sm:$0xff]
    %v42 = vld [vmem:[#allocation5] sm:$0xff]
    %v43 = vld [vmem:[#allocation5 + $0x8] sm:$0xff]
    %v44 = vld [vmem:[#allocation5 + $0x10] sm:$0xff]
    %v45 = vld [vmem:[#allocation5 + $0x18] sm:$0xff]
    %v46 = vld [vmem:[%s2] sm:$0x1]
    %v48 = vlaneseq
    %v49 = vshrl.u32 %v48, 7
    %v50 = vsub.s32 0, %v49
    %v51 = vrot.slane %v46, %v50
    %vm53 = vcmask 261120
    %v55 = vsel %vm53, %v41, 0
    %57 = vmatprep.subr.mxu0 0.0
    %58 = vmatpush1.msra.mxu0 %v42
    %59 = vmatprep.subr.mxu0 0.0
    %60 = vmatpush1.msra.mxu0 %v43
    %61 = vmatprep.subr.mxu0 0.0
    %62 = vmatpush1.msra.mxu0 %v44
    %63 = vmatprep.subr.mxu0 0.0
    %64 = vmatpush1.msra.mxu0 %v45
    %65 = vmatprep.subr.mxu0 0.0
    %66 = vmatpush1.msra.mxu0 0.0
    %67 = vmatprep.subr.mxu0 0.0
    %68 = vmatpush1.msra.mxu0 0.0
    %69 = vmatprep.subr.mxu0 0.0
    %70 = vmatpush1.msra.mxu0 0.0
    %71 = vmatprep.subr.mxu0 0.0
    %72 = vmatpush1.msra.mxu0 0.0
    %73 = vmatprep.subr.mxu0 0.0
    %74 = vmatpush1.msra.mxu0 0.0
    %75 = vmatprep.subr.mxu0 0.0
    %76 = vmatpush1.msra.mxu0 0.0
    %77 = vmatprep.subr.mxu0 0.0
    %78 = vmatpush1.msra.mxu0 0.0
    %79 = vmatprep.subr.mxu0 0.0
    %80 = vmatpush1.msra.mxu0 0.0
    %81 = vmatprep.subr.mxu0 0.0
    %82 = vmatpush1.msra.mxu0 0.0
    %83 = vmatprep.subr.mxu0 0.0
    %84 = vmatpush1.msra.mxu0 0.0
    %85 = vmatprep.subr.mxu0 0.0
    %86 = vmatpush1.msra.mxu0 0.0
    %87 = vmatprep.subr.mxu0 0.0
    %88 = vmatpush1.msra.mxu0 0.0
    %89 = vmatprep.subr.mxu0 0.0
    %90 = vmatpush1.msra.mxu0 0.0
    %91 = vmatprep.subr.mxu0 0.0
    %92 = vmatpush1.msra.mxu0 0.0
    %93 = vmatprep.subr.mxu0 0.0
    %94 = vmatpush1.msra.mxu0 0.0
    %95 = vmatprep.subr.mxu0 0.0
    %96 = vmatpush1.msra.mxu0 0.0
    %97 = vmatprep.subr.mxu0 0.0
    %98 = vmatpush1.msra.mxu0 0.0
    %99 = vmatprep.subr.mxu0 0.0
    %100 = vmatpush1.msra.mxu0 0.0
    %101 = vmatprep.subr.mxu0 0.0
    %102 = vmatpush1.msra.mxu0 0.0
    %103 = vmatprep.subr.mxu0 0.0
    %104 = vmatpush1.msra.mxu0 0.0
    %105 = vmatprep.subr.mxu0 0.0
    %106 = vmatpush1.msra.mxu0 0.0
    %107 = vmatprep.subr.mxu0 0.0
    %108 = vmatpush1.msra.mxu0 0.0
    %109 = vmatprep.subr.mxu0 0.0
    %110 = vmatpush1.msra.mxu0 0.0
    %111 = vmatprep.subr.mxu0 0.0
    %112 = vmatpush1.msra.mxu0 0.0
    %113 = vmatprep.subr.mxu0 0.0
    %114 = vmatpush1.msra.mxu0 0.0
    %115 = vmatprep.subr.mxu0 0.0
    %116 = vmatpush1.msra.mxu0 0.0
    %117 = vmatprep.subr.mxu0 0.0
    %118 = vmatpush1.msra.mxu0 0.0
    %119 = vmatprep.subr.mxu0 0.0
    %120 = vmatpush1.msra.mxu0 0.0
    %121 = vmatprep.mubr.f32.mxu0 0.0
    %122 = vmatmul.mubr.f32.gmra.mrb[0].mxu0 %v55
    %v123 = vpop.f32.mrb[0].mxu0
    %v124 = vadd.f32 %v51, %v123
    %v125 = vpop.f32.mrb[0].mxu0
    %126 = vdwg.mxu0
    %127 = vst [vmem:[#allocation7] sm:$0xff] %v124
    // Predicated region
    $region22: #{tpu_custom_call.1} parent=1 // pred_check
      _
    $region23: #{tpu_custom_call.1} parent=1 // pred_check_branch
      %129 = sbr.rel (0) target = $region25
    $region24: #{tpu_custom_call.1} parent=1 // pred_region
      %s131 = ssub.s32 128, 128
      %132 = vsyncadd [#allocation4], %s131
      %s134 = sshll.u32 [#allocation7], 4
      %s135 = int_to_ptr.vmem [resolvable:$true] %s134
      %137 = dma.vmem_to_hbm [thread:$0]  %s135, 128, %s3, [#allocation4]
    $region25: #{tpu_custom_call.1} parent=1 // pred_fallthru
      _
    // Predicated region
    $region26: #{tpu_custom_call.1} parent=1 // pred_check
      _
    $region27: #{tpu_custom_call.1} parent=1 // pred_check_branch
      %139 = sbr.rel (0) target = $region29
    $region28: #{tpu_custom_call.1} parent=1 // pred_region
      %140 = dma.done [#allocation4], 128
    $region29: #{tpu_custom_call.1} parent=1 // pred_fallthru
      _
    %141 = vsyncpa [#allocation3], 1
    %142 = vsyncpa [#allocation6], 1
    %143 = vsyncpa [#allocation4], 1

</llo_original>
